<compile_context>
chip_gen: v6e
topology: v6e:2x2x1
jax: 0.10.0
libtpu: 0.0.40
codegen_flags: <defaults>
</compile_context>

<pallas_src>
import jax
import jax.numpy as jnp
from jax.experimental import pallas as pl
from jax.experimental.pallas import tpu as pltpu

EPS = 1e-12  # F.normalize default eps


def _netvlad_kernel(normalize_input):
    def kernel(x_ref, whi_ref, wlo_ref, b_ref, cent_ref, o_ref, asum_ref):
        # x_ref:    (C, TP)  one spatial tile of one batch element
        # whi_ref:  (K, C)   bf16 high half of 2*alpha*centroids (grid-resident)
        # wlo_ref:  (K, C)   bf16 low  half of 2*alpha*centroids (grid-resident)
        # b_ref:    (K, 1)   f32  -alpha*||centroid_k||          (grid-resident)
        # cent_ref: (K, C)   f32  centroids                      (grid-resident)
        # o_ref:    (K, C)   f32  output block; doubles as the agg accumulator
        #                         (resident across the p axis).
        # asum_ref: (K, 1)   f32  scratch: sum_p assign[k, p]
        p = pl.program_id(1)

        @pl.when(p == 0)
        def _init():
            o_ref[...] = jnp.zeros_like(o_ref)
            asum_ref[...] = jnp.zeros_like(asum_ref)

        x = x_ref[...].astype(jnp.float32)                        # (C, TP)

        # (1) descriptor-wise L2 normalization over channels (sublane axis).
        if normalize_input:
            ssq = jnp.sum(x * x, axis=0, keepdims=True)           # (1, TP)
            xn = x * jax.lax.rsqrt(jnp.maximum(ssq, EPS * EPS))
        else:
            xn = x

        # bf16 hi/lo split of the normalized descriptors.
        xn_hi = xn.astype(jnp.bfloat16)
        xn_lo = (xn - xn_hi.astype(jnp.float32)).astype(jnp.bfloat16)

        # (2) 1x1 conv: logits[k, p] = sum_c w[k, c] * xn[c, p] + b[k].
        # Three bf16 MXU passes ~= f32 accuracy; the kernel is HBM-bound so
        # the extra passes cost no wall time.
        dims = (((1,), (0,)), ((), ()))
        logits = jax.lax.dot_general(whi_ref[...], xn_hi, dims,
                                     preferred_element_type=jnp.float32)
        logits += jax.lax.dot_general(whi_ref[...], xn_lo, dims,
                                      preferred_element_type=jnp.float32)
        logits += jax.lax.dot_general(wlo_ref[...], xn_hi, dims,
                                      preferred_element_type=jnp.float32)
        logits += b_ref[...]                                      # (K, TP)

        # (3) softmax over clusters (sublane axis, K entries).
        m = jnp.max(logits, axis=0, keepdims=True)
        e = jnp.exp(logits - m)                                   # EUP
        assign = e / jnp.sum(e, axis=0, keepdims=True)            # (K, TP) f32

        # (4a) accumulate assignment mass and assignment-weighted descriptors.
        asum_ref[...] += jnp.sum(assign, axis=1, keepdims=True)   # (K, 1)
        o_ref[...] += jax.lax.dot_general(
            assign.astype(jnp.bfloat16), xn_hi,
            (((1,), (1,)), ((), ())),                             # contract TP
            preferred_element_type=jnp.float32)                   # (K, C)

        # (4b)-(6) finalize once per batch element (last P-tile).
        @pl.when(p == pl.num_programs(1) - 1)
        def _finalize():
            vlad = o_ref[...] - asum_ref[...] * cent_ref[...]     # (K, C)
            # intra-normalize each cluster row over the descriptor dimension
            ssq_k = jnp.sum(vlad * vlad, axis=-1, keepdims=True)
            vlad = vlad * jax.lax.rsqrt(jnp.maximum(ssq_k, EPS * EPS))
            # global L2 normalize over the flattened (K*C) vector
            tot = jnp.sum(vlad * vlad, keepdims=True)             # (1, 1)
            vlad = vlad * jax.lax.rsqrt(jnp.maximum(tot, EPS * EPS))
            o_ref[...] = vlad.astype(o_ref.dtype)

    return kernel


def netvlad_forward(x_nchw, centroids, alpha=100.0, normalize_input=True,
                    conv_weight=None, conv_bias=None, tile_p=None):
    """NetVLAD forward. x_nchw: (N, C, H, W); centroids: (K, C) -> (N, K*C).

    conv_weight / conv_bias default to the NetVLAD._init_params tying
    (w = 2*alpha*centroids, b = -alpha*||c_k||).  For a trained module whose
    conv parameters have diverged from the centroids, pass them explicitly.
    """
    N, C, H, W = x_nchw.shape
    K = centroids.shape[0]
    P = H * W

    x_ncp = x_nchw.reshape(N, C, P)        # free reshape, no HBM transpose

    centroids = centroids.astype(jnp.float32)
    if conv_weight is None:
        w = 2.0 * alpha * centroids                               # (K, C)
    else:
        w = conv_weight.reshape(K, C).astype(jnp.float32)
    if conv_bias is None:
        b = -alpha * jnp.sqrt(jnp.sum(centroids * centroids, axis=1))
    else:
        b = conv_bias
    b = b.astype(jnp.float32).reshape(K, 1)

    # bf16 hi/lo split of the conv weight (hoisted; grid-resident inputs).
    w_hi = w.astype(jnp.bfloat16)
    w_lo = (w - w_hi.astype(jnp.float32)).astype(jnp.bfloat16)

    # Spatial tile: big enough to amortize per-step overhead, small enough to
    # stay VMEM-portable (v7x scoped default). Must divide P exactly.
    if tile_p is None:
        tile_p = next((t for t in (512, 256, 128) if P % t == 0), P)
    # TODO(synk): pad/mask the last P-tile instead of falling back to
    # tile_p = P when P is not a multiple of 128.
    assert P % tile_p == 0, (P, tile_p)
    n_ptiles = P // tile_p

    out = pl.pallas_call(
        _netvlad_kernel(normalize_input),
        out_shape=jax.ShapeDtypeStruct((N, K, C), jnp.float32),
        grid_spec=pltpu.PrefetchScalarGridSpec(
            num_scalar_prefetch=0,
            grid=(N, n_ptiles),
            in_specs=[
                pl.BlockSpec((None, C, tile_p), lambda n, p: (n, 0, p)),
                pl.BlockSpec((K, C), lambda n, p: (0, 0)),
                pl.BlockSpec((K, C), lambda n, p: (0, 0)),
                pl.BlockSpec((K, 1), lambda n, p: (0, 0)),
                pl.BlockSpec((K, C), lambda n, p: (0, 0)),
            ],
            out_specs=pl.BlockSpec((None, K, C), lambda n, p: (n, 0, 0)),
            scratch_shapes=[
                pltpu.VMEM((K, 1), jnp.float32),   # a_sum accumulator
            ],
        ),
        compiler_params=pltpu.CompilerParams(
            dimension_semantics=("parallel", "arbitrary")),
        # TODO(synk): for v7x with N < 2, split the P reduction across both
        # TensorCores (two parallel half-grids + a tiny combine pass).
    )(x_ncp, w_hi, w_lo, b, centroids)

    return out.reshape(N, K * C)


def _netvlad_ref(x_nchw, centroids, alpha=100.0, normalize_input=True):
    """Pure-JAX f32 reference mirroring the PyTorch forward exactly."""
    N, C, H, W = x_nchw.shape
    x = x_nchw.astype(jnp.float32)
    if normalize_input:
        x = x / jnp.maximum(jnp.linalg.norm(x, axis=1, keepdims=True), EPS)
    xf = x.reshape(N, C, -1)                                      # (N, C, P)
    w = 2.0 * alpha * centroids                                   # (K, C)
    b = -alpha * jnp.linalg.norm(centroids, axis=1)               # (K,)
    hp = jax.lax.Precision.HIGHEST                                # true-f32 dots
    logits = jnp.einsum('kc,ncp->nkp', w, xf, precision=hp) + b[None, :, None]
    assign = jax.nn.softmax(logits, axis=1)                       # (N, K, P)
    agg = jnp.einsum('nkp,ncp->nkc', assign, xf, precision=hp)    # (N, K, C)
    a_sum = jnp.sum(assign, axis=-1)                              # (N, K)
    vlad = agg - a_sum[:, :, None] * centroids[None, :, :]        # (N, K, C)
    vlad = vlad / jnp.maximum(
        jnp.linalg.norm(vlad, axis=2, keepdims=True), EPS)
    vlad = vlad.reshape(N, -1)
    vlad = vlad / jnp.maximum(
        jnp.linalg.norm(vlad, axis=1, keepdims=True), EPS)
    return vlad


if __name__ == "__main__":
    # Small shapes consistent with the module (dim shrunk from 512 for speed).
    N, C, H, W = 2, 64, 16, 16     # P = 256
    K = 16
    ALPHA = 100.0

    key = jax.random.PRNGKey(0)
    kx, kc = jax.random.split(key)
    x = jax.random.normal(kx, (N, C, H, W), dtype=jnp.float32)
    # centroids ~ torch.rand(K, dim): uniform [0, 1)
    centroids = jax.random.uniform(kc, (K, C), dtype=jnp.float32)

    # tile_p=128 -> grid (N, 2): exercises the multi-tile P accumulation path.
    fwd = jax.jit(lambda a, c: netvlad_forward(a, c, alpha=ALPHA, tile_p=128))
    out = jax.block_until_ready(fwd(x, centroids))
    assert out.shape == (N, K * C)

    ref = _netvlad_ref(x, centroids, alpha=ALPHA)
    max_err = float(jnp.max(jnp.abs(out - ref)))
    assert jnp.allclose(out, ref, atol=2e-3, rtol=2e-3), max_err

    print("KERNEL_OK")
</pallas_src>

<mosaic_0001>
module attributes {stable_mosaic.version = 11 : i64} {
  func.func @kernel(%arg0: i32, %arg1: i32, %arg2: memref<1x64x128xf32, #tpu.memory_space<vmem>>, %arg3: memref<16x64xbf16, #tpu.memory_space<vmem>>, %arg4: memref<16x64xbf16, #tpu.memory_space<vmem>>, %arg5: memref<16x1xf32, #tpu.memory_space<vmem>>, %arg6: memref<16x64xf32, #tpu.memory_space<vmem>>, %arg7: memref<1x16x64xf32, #tpu.memory_space<vmem>>, %arg8: memref<16x1xf32, #tpu.memory_space<vmem>>) attributes {dimension_semantics = [#tpu.dimension_semantics<parallel>, #tpu.dimension_semantics<arbitrary>], iteration_bounds = array<i64: 2, 2>, scalar_prefetch = 0 : i64, scratch_operands = 1 : i64, tpu.core_type = #tpu.core_type<tc>, window_params = [{transform_indices = @transform_0, window_bounds = array<i64: 1, 64, 128>}, {pipeline_mode = #tpu.pipeline_mode<synchronous>, transform_indices = @transform_1, window_bounds = array<i64: 16, 64>}, {pipeline_mode = #tpu.pipeline_mode<synchronous>, transform_indices = @transform_2, window_bounds = array<i64: 16, 64>}, {pipeline_mode = #tpu.pipeline_mode<synchronous>, transform_indices = @transform_3, window_bounds = array<i64: 16, 1>}, {pipeline_mode = #tpu.pipeline_mode<synchronous>, transform_indices = @transform_4, window_bounds = array<i64: 16, 64>}, {transform_indices = @transform_5, window_bounds = array<i64: 1, 16, 64>}]} {
    %c0_i32 = arith.constant 0 : i32
    %0 = arith.cmpi eq, %arg1, %c0_i32 : i32
    %1 = arith.extui %0 : i1 to i32
    %c0_i32_0 = arith.constant 0 : i32
    %2 = arith.cmpi ne, %1, %c0_i32_0 : i32
    scf.if %2 {
      %cst_30 = arith.constant 0.000000e+00 : f32
      %53 = vector.broadcast %cst_30 : f32 to vector<16x64xf32>
      %c0_31 = arith.constant 0 : index
      %c0_32 = arith.constant 0 : index
      %c0_33 = arith.constant 0 : index
      %54 = vector.load %arg7[%c0_31, %c0_32, %c0_33] : memref<1x16x64xf32, #tpu.memory_space<vmem>>, vector<1x16x64xf32>
      %55 = vector.shape_cast %54 : vector<1x16x64xf32> to vector<16x64xf32>
      %56 = vector.shape_cast %53 : vector<16x64xf32> to vector<1x16x64xf32>
      tpu.vector_store %arg7[%c0_31, %c0_32, %c0_33], %56 {strides = array<i32>} : memref<1x16x64xf32, #tpu.memory_space<vmem>>, vector<1x16x64xf32>,
      %cst_34 = arith.constant 0.000000e+00 : f32
      %57 = vector.broadcast %cst_34 : f32 to vector<16x1xf32>
      %c0_35 = arith.constant 0 : index
      %c0_36 = arith.constant 0 : index
      %58 = vector.load %arg8[%c0_35, %c0_36] : memref<16x1xf32, #tpu.memory_space<vmem>>, vector<16x1xf32>
      tpu.vector_store %arg8[%c0_35, %c0_36], %57 {strides = array<i32>} : memref<16x1xf32, #tpu.memory_space<vmem>>, vector<16x1xf32>,
    } else {
    }
    %c0 = arith.constant 0 : index
    %c0_1 = arith.constant 0 : index
    %c0_2 = arith.constant 0 : index
    %3 = vector.load %arg2[%c0, %c0_1, %c0_2] : memref<1x64x128xf32, #tpu.memory_space<vmem>>, vector<1x64x128xf32>
    %4 = vector.shape_cast %3 : vector<1x64x128xf32> to vector<64x128xf32>
    %5 = arith.mulf %4, %4 : vector<64x128xf32>
    %cst = arith.constant dense<0.000000e+00> : vector<128xf32>
    %6 = vector.multi_reduction <add>, %5, %cst [0] : vector<64x128xf32> to vector<128xf32>
    %7 = vector.shape_cast %6 : vector<128xf32> to vector<1x128xf32>
    %cst_3 = arith.constant 1.000000e-24 : f32
    %8 = vector.broadcast %cst_3 : f32 to vector<1x128xf32>
    %9 = arith.maximumf %7, %8 : vector<1x128xf32>
    %10 = math.rsqrt %9 : vector<1x128xf32>
    %11 = vector.broadcast %10 : vector<1x128xf32> to vector<64x128xf32>
    %12 = arith.mulf %4, %11 : vector<64x128xf32>
    %13 = arith.truncf %12 : vector<64x128xf32> to vector<64x128xbf16>
    %14 = arith.extf %13 : vector<64x128xbf16> to vector<64x128xf32>
    %15 = arith.subf %12, %14 : vector<64x128xf32>
    %16 = arith.truncf %15 : vector<64x128xf32> to vector<64x128xbf16>
    %c0_4 = arith.constant 0 : index
    %c0_5 = arith.constant 0 : index
    %17 = vector.load %arg3[%c0_4, %c0_5] : memref<16x64xbf16, #tpu.memory_space<vmem>>, vector<16x64xbf16>
    %cst_6 = arith.constant dense<0.000000e+00> : vector<16x128xf32>
    %18 = tpu.matmul %17, %13, %cst_6 {dimension_numbers = #tpu.dot_dimension_numbers<[1], [0], [0], [1], [0, 0, 1, 1], [], []>} : vector<16x64xbf16>, vector<64x128xbf16>, vector<16x128xf32> -> vector<16x128xf32>
    %c0_7 = arith.constant 0 : index
    %c0_8 = arith.constant 0 : index
    %19 = vector.load %arg3[%c0_7, %c0_8] : memref<16x64xbf16, #tpu.memory_space<vmem>>, vector<16x64xbf16>
    %cst_9 = arith.constant dense<0.000000e+00> : vector<16x128xf32>
    %20 = tpu.matmul %19, %16, %cst_9 {dimension_numbers = #tpu.dot_dimension_numbers<[1], [0], [0], [1], [0, 0, 1, 1], [], []>} : vector<16x64xbf16>, vector<64x128xbf16>, vector<16x128xf32> -> vector<16x128xf32>
    %21 = arith.addf %18, %20 : vector<16x128xf32>
    %c0_10 = arith.constant 0 : index
    %c0_11 = arith.constant 0 : index
    %22 = vector.load %arg4[%c0_10, %c0_11] : memref<16x64xbf16, #tpu.memory_space<vmem>>, vector<16x64xbf16>
    %cst_12 = arith.constant dense<0.000000e+00> : vector<16x128xf32>
    %23 = tpu.matmul %22, %13, %cst_12 {dimension_numbers = #tpu.dot_dimension_numbers<[1], [0], [0], [1], [0, 0, 1, 1], [], []>} : vector<16x64xbf16>, vector<64x128xbf16>, vector<16x128xf32> -> vector<16x128xf32>
    %24 = arith.addf %21, %23 : vector<16x128xf32>
    %c0_13 = arith.constant 0 : index
    %c0_14 = arith.constant 0 : index
    %25 = vector.load %arg5[%c0_13, %c0_14] : memref<16x1xf32, #tpu.memory_space<vmem>>, vector<16x1xf32>
    %26 = vector.broadcast %25 : vector<16x1xf32> to vector<16x128xf32>
    %27 = arith.addf %24, %26 : vector<16x128xf32>
    %cst_15 = arith.constant dense<0xFF800000> : vector<128xf32>
    %28 = vector.multi_reduction <maximumf>, %27, %cst_15 [0] : vector<16x128xf32> to vector<128xf32>
    %29 = vector.shape_cast %28 : vector<128xf32> to vector<1x128xf32>
    %30 = vector.broadcast %29 : vector<1x128xf32> to vector<16x128xf32>
    %31 = arith.subf %27, %30 : vector<16x128xf32>
    %32 = math.exp %31 : vector<16x128xf32>
    %cst_16 = arith.constant dense<0.000000e+00> : vector<128xf32>
    %33 = vector.multi_reduction <add>, %32, %cst_16 [0] : vector<16x128xf32> to vector<128xf32>
    %34 = vector.shape_cast %33 : vector<128xf32> to vector<1x128xf32>
    %35 = vector.broadcast %34 : vector<1x128xf32> to vector<16x128xf32>
    %36 = arith.divf %32, %35 : vector<16x128xf32>
    %c0_17 = arith.constant 0 : index
    %c0_18 = arith.constant 0 : index
    %37 = vector.load %arg8[%c0_17, %c0_18] : memref<16x1xf32, #tpu.memory_space<vmem>>, vector<16x1xf32>
    %cst_19 = arith.constant dense<0.000000e+00> : vector<16xf32>
    %38 = vector.multi_reduction <add>, %36, %cst_19 [1] : vector<16x128xf32> to vector<16xf32>
    %39 = vector.shape_cast %38 : vector<16xf32> to vector<16x1xf32>
    %40 = arith.addf %37, %39 : vector<16x1xf32>
    %c0_20 = arith.constant 0 : index
    %c0_21 = arith.constant 0 : index
    %41 = vector.load %arg8[%c0_20, %c0_21] : memref<16x1xf32, #tpu.memory_space<vmem>>, vector<16x1xf32>
    tpu.vector_store %arg8[%c0_20, %c0_21], %40 {strides = array<i32>} : memref<16x1xf32, #tpu.memory_space<vmem>>, vector<16x1xf32>,
    %c0_22 = arith.constant 0 : index
    %c0_23 = arith.constant 0 : index
    %c0_24 = arith.constant 0 : index
    %42 = vector.load %arg7[%c0_22, %c0_23, %c0_24] : memref<1x16x64xf32, #tpu.memory_space<vmem>>, vector<1x16x64xf32>
    %43 = vector.shape_cast %42 : vector<1x16x64xf32> to vector<16x64xf32>
    %44 = arith.truncf %36 : vector<16x128xf32> to vector<16x128xbf16>
    %cst_25 = arith.constant dense<0.000000e+00> : vector<16x64xf32>
    %45 = tpu.matmul %44, %13, %cst_25 {dimension_numbers = #tpu.dot_dimension_numbers<[1], [1], [0], [0], [0, 0, 1, 0], [], []>} : vector<16x128xbf16>, vector<64x128xbf16>, vector<16x64xf32> -> vector<16x64xf32>
    %46 = arith.addf %43, %45 : vector<16x64xf32>
    %c0_26 = arith.constant 0 : index
    %c0_27 = arith.constant 0 : index
    %c0_28 = arith.constant 0 : index
    %47 = vector.load %arg7[%c0_26, %c0_27, %c0_28] : memref<1x16x64xf32, #tpu.memory_space<vmem>>, vector<1x16x64xf32>
    %48 = vector.shape_cast %47 : vector<1x16x64xf32> to vector<16x64xf32>
    %49 = vector.shape_cast %46 : vector<16x64xf32> to vector<1x16x64xf32>
    tpu.vector_store %arg7[%c0_26, %c0_27, %c0_28], %49 {strides = array<i32>} : memref<1x16x64xf32, #tpu.memory_space<vmem>>, vector<1x16x64xf32>,
    %c1_i32 = arith.constant 1 : i32
    %50 = arith.cmpi eq, %arg1, %c1_i32 : i32
    %51 = arith.extui %50 : i1 to i32
    %c0_i32_29 = arith.constant 0 : i32
    %52 = arith.cmpi ne, %51, %c0_i32_29 : i32
    scf.if %52 {
      %c0_30 = arith.constant 0 : index
      %c0_31 = arith.constant 0 : index
      %c0_32 = arith.constant 0 : index
      %53 = vector.load %arg7[%c0_30, %c0_31, %c0_32] : memref<1x16x64xf32, #tpu.memory_space<vmem>>, vector<1x16x64xf32>
      %54 = vector.shape_cast %53 : vector<1x16x64xf32> to vector<16x64xf32>
      %c0_33 = arith.constant 0 : index
      %c0_34 = arith.constant 0 : index
      %55 = vector.load %arg8[%c0_33, %c0_34] : memref<16x1xf32, #tpu.memory_space<vmem>>, vector<16x1xf32>
      %c0_35 = arith.constant 0 : index
      %c0_36 = arith.constant 0 : index
      %56 = vector.load %arg6[%c0_35, %c0_36] : memref<16x64xf32, #tpu.memory_space<vmem>>, vector<16x64xf32>
      %57 = vector.broadcast %55 : vector<16x1xf32> to vector<16x64xf32>
      %58 = arith.mulf %57, %56 : vector<16x64xf32>
      %59 = arith.subf %54, %58 : vector<16x64xf32>
      %60 = arith.mulf %59, %59 : vector<16x64xf32>
      %cst_37 = arith.constant dense<0.000000e+00> : vector<16xf32>
      %61 = vector.multi_reduction <add>, %60, %cst_37 [1] : vector<16x64xf32> to vector<16xf32>
      %62 = vector.shape_cast %61 : vector<16xf32> to vector<16x1xf32>
      %cst_38 = arith.constant 1.000000e-24 : f32
      %63 = vector.broadcast %cst_38 : f32 to vector<16x1xf32>
      %64 = arith.maximumf %62, %63 : vector<16x1xf32>
      %65 = math.rsqrt %64 : vector<16x1xf32>
      %66 = vector.broadcast %65 : vector<16x1xf32> to vector<16x64xf32>
      %67 = arith.mulf %59, %66 : vector<16x64xf32>
      %68 = arith.mulf %67, %67 : vector<16x64xf32>
      %69 = vector.shape_cast %68 : vector<16x64xf32> to vector<1x16x64xf32>
      %cst_39 = arith.constant dense<0.000000e+00> : vector<1xf32>
      %70 = vector.multi_reduction <add>, %69, %cst_39 [1, 2] : vector<1x16x64xf32> to vector<1xf32>
      %71 = vector.shape_cast %70 : vector<1xf32> to vector<1x1x1xf32>
      %72 = vector.extract %71[0, 0, 0] : f32 from vector<1x1x1xf32>
      %73 = vector.broadcast %72 : f32 to vector<1x1xf32>
      %cst_40 = arith.constant 1.000000e-24 : f32
      %74 = vector.broadcast %cst_40 : f32 to vector<1x1xf32>
      %75 = arith.maximumf %73, %74 : vector<1x1xf32>
      %76 = math.rsqrt %75 : vector<1x1xf32>
      %77 = vector.broadcast %76 : vector<1x1xf32> to vector<16x64xf32>
      %78 = arith.mulf %67, %77 : vector<16x64xf32>
      %c0_41 = arith.constant 0 : index
      %c0_42 = arith.constant 0 : index
      %c0_43 = arith.constant 0 : index
      %79 = vector.load %arg7[%c0_41, %c0_42, %c0_43] : memref<1x16x64xf32, #tpu.memory_space<vmem>>, vector<1x16x64xf32>
      %80 = vector.shape_cast %79 : vector<1x16x64xf32> to vector<16x64xf32>
      %81 = vector.shape_cast %78 : vector<16x64xf32> to vector<1x16x64xf32>
      tpu.vector_store %arg7[%c0_41, %c0_42, %c0_43], %81 {strides = array<i32>} : memref<1x16x64xf32, #tpu.memory_space<vmem>>, vector<1x16x64xf32>,
    } else {
    }
    return
  }
  func.func @transform_0(%arg0: i32, %arg1: i32) -> (i32, i32, i32) {
    %c0_i32 = arith.constant 0 : i32
    %c0_i32_0 = arith.constant 0 : i32
    return %arg0, %c0_i32, %arg1 : i32, i32, i32
  }
  func.func @transform_1(%arg0: i32, %arg1: i32) -> (i32, i32) {
    %c0_i32 = arith.constant 0 : i32
    %c0_i32_0 = arith.constant 0 : i32
    %c0_i32_1 = arith.constant 0 : i32
    return %c0_i32, %c0_i32_0 : i32, i32
  }
  func.func @transform_2(%arg0: i32, %arg1: i32) -> (i32, i32) {
    %c0_i32 = arith.constant 0 : i32
    %c0_i32_0 = arith.constant 0 : i32
    %c0_i32_1 = arith.constant 0 : i32
    return %c0_i32, %c0_i32_0 : i32, i32
  }
  func.func @transform_3(%arg0: i32, %arg1: i32) -> (i32, i32) {
    %c0_i32 = arith.constant 0 : i32
    %c0_i32_0 = arith.constant 0 : i32
    %c0_i32_1 = arith.constant 0 : i32
    return %c0_i32, %c0_i32_0 : i32, i32
  }
  func.func @transform_4(%arg0: i32, %arg1: i32) -> (i32, i32) {
    %c0_i32 = arith.constant 0 : i32
    %c0_i32_0 = arith.constant 0 : i32
    %c0_i32_1 = arith.constant 0 : i32
    return %c0_i32, %c0_i32_0 : i32, i32
  }
  func.func @transform_5(%arg0: i32, %arg1: i32) -> (i32, i32, i32) {
    %c0_i32 = arith.constant 0 : i32
    %c0_i32_0 = arith.constant 0 : i32
    %c0_i32_1 = arith.constant 0 : i32
    return %arg0, %c0_i32, %c0_i32_0 : i32, i32, i32
  }
}

</mosaic_0001>

<llo_original>
// kernel: _lambda_.1
$region0: #{_lambda_.1}
  #allocation0 [shape = 'u32[]', space=smem, size = 0x4, offset = 0x4, fixed_abs, tag = 'smem constant byte address 0x4 - core index']
  #allocation1 [shape = 'u32[144,128]{1,0:T(1,128)}', space=vmem, size = 0x12000, scoped, tag = 'internal scratch']
  #allocation2 [shape = 'f32[16,1]{1,0:T(8,128)}', space=vmem, size = 0x2000, scoped, tag = 'scratch operand']
  %s0 = inlined_call_operand.vmem [shape: f32[2,64,256], index: 0, kind: input, shape index: {}]
  %s1 = inlined_call_operand.vmem [shape: bf16[16,64], index: 1, kind: input, shape index: {}]
  %s2 = inlined_call_operand.vmem [shape: bf16[16,64], index: 2, kind: input, shape index: {}]
  %s3 = inlined_call_operand.vmem [shape: f32[16,1], index: 3, kind: input, shape index: {}]
  %s4 = inlined_call_operand.vmem [shape: f32[16,64], index: 4, kind: input, shape index: {}]
  %s5 = inlined_call_operand.vmem [shape: f32[2,16,64], index: 5, kind: output, shape index: {}]
  %s6 = sld [smem:[#allocation0]]
  $region99: #{_lambda_.1} parent=0
    _
  %s8 = ssub.s32 1, %s6
  %s9 = scalar_select 0, %s8, %s6
  $region1: #{_lambda_.1} parent=0
    #allocation3 [shape = 'u8[65536]{0}', space=vmem, size = 0x10000, scoped, tag = 'input window, operand 0']
    loop: start=0, step=1, limit=6
    $region2: #{_lambda_.1} parent=1 // loop_pre_header
      _
    $region3: #{_lambda_.1} parent=1 // loop_header
      %s11 = sphi 0, %s15
      %p12 = scmp.ge.s32.totalorder %s11, 6
      %s18 = sphi 0, %s30
      %s19 = sphi 0, %s26
      %s20 = sphi 0, %s18
      %s21 = sphi 0, %s19
      %s22 = sphi 0, %s20
      %s23 = sphi 0, %s21
      %s35 = sphi 0, %s37
      %s38 = sphi 0, %s35
      %s39 = sphi 0, %s38
      %s55 = sphi 0, %s39
      %s59 = sphi 0, %s59
      %s61 = sphi 0, %s59
      %s62 = sphi 0, %s61
      %s76 = sphi 0, %s62
      %s80 = sphi 0, %s80
      %s82 = sphi 0, %s80
      %s83 = sphi 0, %s82
      %s97 = sphi 0, %s83
      %s101 = sphi 0, %s101
      %s103 = sphi 0, %s101
      %s104 = sphi 0, %s103
      %s118 = sphi 0, %s104
      %s122 = sphi 0, %s122
      %s124 = sphi 0, %s122
      %s125 = sphi 0, %s124
      %s139 = sphi 0, %s125
      %s145 = sphi 0, %s147
      %s148 = sphi 0, %s145
      %s149 = sphi 0, %s148
      %s165 = sphi 0, %s149
    $region4: #{_lambda_.1} parent=1 // loop_header_branch
      %14 = sbr.rel (%p12) target = $region8
    $region5: #{_lambda_.1} parent=1 // loop_body
      %s16 = ssub.s32 %s11, 1
      %s17 = ssub.s32 %s11, 2
      %s24 = sadd.s32 1, %s19
      %p25 = scmp.ge.s32.totalorder %s24, 2
      %s26 = scalar_select %p25, 0, %s24
      %s27 = sadd.s32 1, %s18
      %s28 = scalar_select %p25, %s27, %s18
      %p29 = scmp.ge.s32.totalorder %s28, 2
      %s30 = scalar_select %p29, 0, %s28
      %s31 = ssub.s32 %s18, %s30
      %s32 = ssub.s32 %s19, %s26
      %s33 = sor.u32 %s31, %s32
      %p34 = scmp.eq.s32.totalorder %s33, 0
      %s36 = sadd.s32 %s35, 1
      %s37 = scalar_select %p34, %s35, %s36
      %p40 = pneg %p34
      %p41 = scmp.eq.s32.totalorder %s11, 3
      %p42 = por %p40, %p41
      %p43 = scmp.ne.s32.totalorder %s35, %s38
      %p44 = scmp.eq.s32.totalorder %s11, 0
      %p45 = por %p43, %p44
      %p46 = scmp.ne.s32.totalorder %s35, %s38
      %p47 = scmp.eq.s32.totalorder %s16, 3
      %p48 = por %p46, %p47
      %p49 = scmp.ne.s32.totalorder %s38, %s39
      %p50 = scmp.eq.s32.totalorder %s16, 0
      %p51 = por %p49, %p50
      %p52 = scmp.ne.s32.totalorder %s38, %s39
      %p53 = scmp.eq.s32.totalorder %s17, 3
      %p54 = por %p52, %p53
      %p56 = scmp.ne.s32.totalorder %s39, %s55
      %p57 = scmp.eq.s32.totalorder %s17, 0
      %p58 = por %p56, %p57
      %s60 = sadd.s32 %s59, 1
      %p63 = scmp.eq.s32.totalorder %s11, 3
      %p64 = scmp.ne.s32.totalorder %s59, %s61
      %p65 = scmp.eq.s32.totalorder %s11, 0
      %p66 = por %p64, %p65
      %p67 = scmp.ne.s32.totalorder %s59, %s61
      %p68 = scmp.eq.s32.totalorder %s16, 3
      %p69 = por %p67, %p68
      %p70 = scmp.ne.s32.totalorder %s61, %s62
      %p71 = scmp.eq.s32.totalorder %s16, 0
      %p72 = por %p70, %p71
      %p73 = scmp.ne.s32.totalorder %s61, %s62
      %p74 = scmp.eq.s32.totalorder %s17, 3
      %p75 = por %p73, %p74
      %p77 = scmp.ne.s32.totalorder %s62, %s76
      %p78 = scmp.eq.s32.totalorder %s17, 0
      %p79 = por %p77, %p78
      %s81 = sadd.s32 %s80, 1
      %p84 = scmp.eq.s32.totalorder %s11, 3
      %p85 = scmp.ne.s32.totalorder %s80, %s82
      %p86 = scmp.eq.s32.totalorder %s11, 0
      %p87 = por %p85, %p86
      %p88 = scmp.ne.s32.totalorder %s80, %s82
      %p89 = scmp.eq.s32.totalorder %s16, 3
      %p90 = por %p88, %p89
      %p91 = scmp.ne.s32.totalorder %s82, %s83
      %p92 = scmp.eq.s32.totalorder %s16, 0
      %p93 = por %p91, %p92
      %p94 = scmp.ne.s32.totalorder %s82, %s83
      %p95 = scmp.eq.s32.totalorder %s17, 3
      %p96 = por %p94, %p95
      %p98 = scmp.ne.s32.totalorder %s83, %s97
      %p99 = scmp.eq.s32.totalorder %s17, 0
      %p100 = por %p98, %p99
      %s102 = sadd.s32 %s101, 1
      %p105 = scmp.eq.s32.totalorder %s11, 3
      %p106 = scmp.ne.s32.totalorder %s101, %s103
      %p107 = scmp.eq.s32.totalorder %s11, 0
      %p108 = por %p106, %p107
      %p109 = scmp.ne.s32.totalorder %s101, %s103
      %p110 = scmp.eq.s32.totalorder %s16, 3
      %p111 = por %p109, %p110
      %p112 = scmp.ne.s32.totalorder %s103, %s104
      %p113 = scmp.eq.s32.totalorder %s16, 0
      %p114 = por %p112, %p113
      %p115 = scmp.ne.s32.totalorder %s103, %s104
      %p116 = scmp.eq.s32.totalorder %s17, 3
      %p117 = por %p115, %p116
      %p119 = scmp.ne.s32.totalorder %s104, %s118
      %p120 = scmp.eq.s32.totalorder %s17, 0
      %p121 = por %p119, %p120
      %s123 = sadd.s32 %s122, 1
      %p126 = scmp.eq.s32.totalorder %s11, 3
      %p127 = scmp.ne.s32.totalorder %s122, %s124
      %p128 = scmp.eq.s32.totalorder %s11, 0
      %p129 = por %p127, %p128
      %p130 = scmp.ne.s32.totalorder %s122, %s124
      %p131 = scmp.eq.s32.totalorder %s16, 3
      %p132 = por %p130, %p131
      %p133 = scmp.ne.s32.totalorder %s124, %s125
      %p134 = scmp.eq.s32.totalorder %s16, 0
      %p135 = por %p133, %p134
      %p136 = scmp.ne.s32.totalorder %s124, %s125
      %p137 = scmp.eq.s32.totalorder %s17, 3
      %p138 = por %p136, %p137
      %p140 = scmp.ne.s32.totalorder %s125, %s139
      %p141 = scmp.eq.s32.totalorder %s17, 0
      %p142 = por %p140, %p141
      %s143 = ssub.s32 %s18, %s30
      %p144 = scmp.eq.s32.totalorder %s143, 0
      %s146 = sadd.s32 %s145, 1
      %s147 = scalar_select %p144, %s145, %s146
      %p150 = pneg %p144
      %p151 = scmp.eq.s32.totalorder %s11, 3
      %p152 = por %p150, %p151
      %p153 = scmp.ne.s32.totalorder %s145, %s148
      %p154 = scmp.eq.s32.totalorder %s11, 0
      %p155 = por %p153, %p154
      %p156 = scmp.ne.s32.totalorder %s145, %s148
      %p157 = scmp.eq.s32.totalorder %s16, 3
      %p158 = por %p156, %p157
      %p159 = scmp.ne.s32.totalorder %s148, %s149
      %p160 = scmp.eq.s32.totalorder %s16, 0
      %p161 = por %p159, %p160
      %p162 = scmp.ne.s32.totalorder %s148, %s149
      %p163 = scmp.eq.s32.totalorder %s17, 3
      %p164 = por %p162, %p163
      %p166 = scmp.ne.s32.totalorder %s149, %s165
      %p167 = scmp.eq.s32.totalorder %s17, 0
      %p168 = por %p166, %p167
      %p169 = scmp.le.s32.totalorder 1, %s11
      %p170 = scmp.lt.s32.totalorder %s11, 5
      %p171 = pnand %p169, %p170
      %p172 = pneg %p171
      // Predicated region
      $region9: #{_lambda_.1} parent=5 // pred_check
        _
      $region10: #{_lambda_.1} parent=5 // pred_check_branch
        %174 = sbr.rel (%p171) target = $region12
      $region11: #{_lambda_.1} parent=5 // pred_region
        %s175 = ssub.s32 %s11, 1
        // Predicated region
        $region13: #{_lambda_.1} parent=11 // pred_check
          %p176 = pneg %p72
        $region14: #{_lambda_.1} parent=11 // pred_check_branch
          %178 = sbr.rel (%p176) target = $region16
        $region15: #{_lambda_.1} parent=11 // pred_region
          _
        $region16: #{_lambda_.1} parent=11 // pred_fallthru
          _
        // Predicated region
        $region17: #{_lambda_.1} parent=11 // pred_check
          %p179 = pneg %p93
        $region18: #{_lambda_.1} parent=11 // pred_check_branch
          %181 = sbr.rel (%p179) target = $region20
        $region19: #{_lambda_.1} parent=11 // pred_region
          _
        $region20: #{_lambda_.1} parent=11 // pred_fallthru
          _
        // Predicated region
        $region21: #{_lambda_.1} parent=11 // pred_check
          %p182 = pneg %p114
        $region22: #{_lambda_.1} parent=11 // pred_check_branch
          %184 = sbr.rel (%p182) target = $region24
        $region23: #{_lambda_.1} parent=11 // pred_region
          _
        $region24: #{_lambda_.1} parent=11 // pred_fallthru
          _
        // Predicated region
        $region25: #{_lambda_.1} parent=11 // pred_check
          %p185 = pneg %p135
        $region26: #{_lambda_.1} parent=11 // pred_check_branch
          %187 = sbr.rel (%p185) target = $region28
        $region27: #{_lambda_.1} parent=11 // pred_region
          _
        $region28: #{_lambda_.1} parent=11 // pred_fallthru
          _
      $region12: #{_lambda_.1} parent=5 // pred_fallthru
        _
      %p188 = scmp.lt.s32.totalorder %s11, 4
      // Predicated region
      $region29: #{_lambda_.1} parent=5 // pred_check
        %p189 = pneg %p188
      $region30: #{_lambda_.1} parent=5 // pred_check_branch
        %191 = sbr.rel (%p189) target = $region32
      $region31: #{_lambda_.1} parent=5 // pred_region
        // Predicated region
        $region33: #{_lambda_.1} parent=31 // pred_check
          %p192 = pneg %p45
        $region34: #{_lambda_.1} parent=31 // pred_check_branch
          %194 = sbr.rel (%p192) target = $region36
        $region35: #{_lambda_.1} parent=31 // pred_region
          %s195 = sand.u32 %s35, 1
          %s196 = sand.u32 %s35, 1
          %s197 = smul.addr %s196, 64
          %s198 = scalar_lea.vmem [#allocation3], %s197
          %s199 = smul.addr %s18, 16
          %s200 = sadd.s32 %s19, %s199
          %s201 = smul.addr %s200, 8
          %s202 = scalar_lea.vmem %s0, %s201
          // Predicated region
          $region37: #{_lambda_.1} parent=35 // pred_check
            _
          $region38: #{_lambda_.1} parent=35 // pred_check_branch
            %204 = sbr.rel (0) target = $region40
          $region39: #{_lambda_.1} parent=35 // pred_region
            // Predicated region
            $region41: #{_lambda_.1} parent=39 // pred_check
              _
            $region42: #{_lambda_.1} parent=39 // pred_check_branch
              %206 = sbr.rel (0) target = $region44
            $region43: #{_lambda_.1} parent=39 // pred_region
              // Predicated region
              $region56: #{_lambda_.1} parent=43 // pred_check
                _
              $region57: #{_lambda_.1} parent=43 // pred_check_branch
                %236 = sbr.rel (0) target = $region59
              $region58: #{_lambda_.1} parent=43 // pred_region
                loop: start=0, step=1, limit=1
                $region60: #{_lambda_.1} parent=58 // loop_pre_header
                  _
                $region61: #{_lambda_.1} parent=58 // loop_header
                  %s238 = sphi 0, %s242
                  %p239 = scmp.ge.s32.totalorder %s238, 1
                  %s243 = sphi %s202, %s202
                  %s244 = sphi %s198, %s198
                $region62: #{_lambda_.1} parent=58 // loop_header_branch
                  %241 = sbr.rel (%p239) target = $region66
                $region63: #{_lambda_.1} parent=58 // loop_body
                  %v245 = vld [vmem:[%s243] sm:$0xff]
                  %246 = vst [vmem:[%s244] sm:$0xff] %v245
                  %v247 = vld [vmem:[%s243 + $0x10] sm:$0xff]
                  %248 = vst [vmem:[%s244 + $0x8] sm:$0xff] %v247
                  %v249 = vld [vmem:[%s243 + $0x20] sm:$0xff]
                  %250 = vst [vmem:[%s244 + $0x10] sm:$0xff] %v249
                  %v251 = vld [vmem:[%s243 + $0x30] sm:$0xff]
                  %252 = vst [vmem:[%s244 + $0x18] sm:$0xff] %v251
                  %v253 = vld [vmem:[%s243 + $0x40] sm:$0xff]
                  %254 = vst [vmem:[%s244 + $0x20] sm:$0xff] %v253
                  %v255 = vld [vmem:[%s243 + $0x50] sm:$0xff]
                  %256 = vst [vmem:[%s244 + $0x28] sm:$0xff] %v255
                  %v257 = vld [vmem:[%s243 + $0x60] sm:$0xff]
                  %258 = vst [vmem:[%s244 + $0x30] sm:$0xff] %v257
                  %v259 = vld [vmem:[%s243 + $0x70] sm:$0xff]
                  %260 = vst [vmem:[%s244 + $0x38] sm:$0xff] %v259
                $region64: #{_lambda_.1} parent=58 // loop_footer
                  %s242 = sadd.s32 1, %s238
                $region65: #{_lambda_.1} parent=58 // loop_footer_branch
                  %237 = sbr.rel target = $region61
                $region66: #{_lambda_.1} parent=58 // loop_exit
                  _
              $region59: #{_lambda_.1} parent=43 // pred_fallthru
                _
              // Predicated region
              $region67: #{_lambda_.1} parent=43 // pred_check
                _
              $region68: #{_lambda_.1} parent=43 // pred_check_branch
                %262 = sbr.rel target = $region70
              $region69: #{_lambda_.1} parent=43 // pred_region
                _
              $region70: #{_lambda_.1} parent=43 // pred_fallthru
                _
            $region44: #{_lambda_.1} parent=39 // pred_fallthru
              _
            // Predicated region
            $region45: #{_lambda_.1} parent=39 // pred_check
              _
            $region46: #{_lambda_.1} parent=39 // pred_check_branch
              %208 = sbr.rel target = $region48
            $region47: #{_lambda_.1} parent=39 // pred_region
              %s210 = ssub.s32 256, 1
              loop: start=0, step=1, limit=1
              $region49: #{_lambda_.1} parent=47 // loop_pre_header
                _
              $region50: #{_lambda_.1} parent=47 // loop_header
                %s212 = sphi 0, %s216
                %p213 = scmp.ge.s32.totalorder %s212, 1
                %s217 = sphi %s202, %s202
                %s218 = sphi %s198, %s198
              $region51: #{_lambda_.1} parent=47 // loop_header_branch
                %215 = sbr.rel (%p213) target = $region55
              $region52: #{_lambda_.1} parent=47 // loop_body
                %v219 = vld [vmem:[%s217] sm:%s210]
                %220 = vst [vmem:[%s218] sm:%s210] %v219
                %v221 = vld [vmem:[%s217 + $0x10] sm:%s210]
                %222 = vst [vmem:[%s218 + $0x8] sm:%s210] %v221
                %v223 = vld [vmem:[%s217 + $0x20] sm:%s210]
                %224 = vst [vmem:[%s218 + $0x10] sm:%s210] %v223
                %v225 = vld [vmem:[%s217 + $0x30] sm:%s210]
                %226 = vst [vmem:[%s218 + $0x18] sm:%s210] %v225
                %v227 = vld [vmem:[%s217 + $0x40] sm:%s210]
                %228 = vst [vmem:[%s218 + $0x20] sm:%s210] %v227
                %v229 = vld [vmem:[%s217 + $0x50] sm:%s210]
                %230 = vst [vmem:[%s218 + $0x28] sm:%s210] %v229
                %v231 = vld [vmem:[%s217 + $0x60] sm:%s210]
                %232 = vst [vmem:[%s218 + $0x30] sm:%s210] %v231
                %v233 = vld [vmem:[%s217 + $0x70] sm:%s210]
                %234 = vst [vmem:[%s218 + $0x38] sm:%s210] %v233
              $region53: #{_lambda_.1} parent=47 // loop_footer
                %s216 = sadd.s32 1, %s212
              $region54: #{_lambda_.1} parent=47 // loop_footer_branch
                %211 = sbr.rel target = $region50
              $region55: #{_lambda_.1} parent=47 // loop_exit
                _
            $region48: #{_lambda_.1} parent=39 // pred_fallthru
              _
          $region40: #{_lambda_.1} parent=35 // pred_fallthru
            _
          %263 = vnop
        $region36: #{_lambda_.1} parent=31 // pred_fallthru
          _
      $region32: #{_lambda_.1} parent=5 // pred_fallthru
        _
      %p264 = scmp.le.s32.totalorder 1, %s11
      %p265 = scmp.lt.s32.totalorder %s11, 5
      %p266 = pnand %p264, %p265
      %p267 = pneg %p266
      // Predicated region
      $region71: #{_lambda_.1} parent=5 // pred_check
        _
      $region72: #{_lambda_.1} parent=5 // pred_check_branch
        %269 = sbr.rel (%p266) target = $region74
      $region73: #{_lambda_.1} parent=5 // pred_region
        %s270 = ssub.s32 %s11, 1
        %s271 = sand.u32 %s38, 1
        %s272 = sand.u32 %s38, 1
        %s273 = smul.addr %s272, 64
        %s274 = scalar_lea.vmem [#allocation3], %s273
        // Predicated region
        $region75: #{_lambda_.1} parent=73 // pred_check
          %p275 = pneg %p51
        $region76: #{_lambda_.1} parent=73 // pred_check_branch
          %277 = sbr.rel (%p275) target = $region78
        $region77: #{_lambda_.1} parent=73 // pred_region
          _
        $region78: #{_lambda_.1} parent=73 // pred_fallthru
          _
        %s278 = sand.u32 %s38, 1
        %s279 = sand.u32 %s38, 1
        %s280 = smul.addr %s279, 64
        %s281 = scalar_lea.vmem [#allocation3], %s280
        %p282 = pneg %p51
        %p283 = pneg %p48
        %p284 = pneg %p72
        %p285 = pneg %p69
        %p286 = pneg %p93
        %p287 = pneg %p90
        %p288 = pneg %p114
        %p289 = pneg %p111
        %p290 = pneg %p135
        %p291 = pneg %p132
        %p292 = pneg %p161
        %p293 = pneg %p158
        %p294 = scmp.lt.s32.totalorder %s20, 1
        %s295 = scalar_select %p294, %s20, 1
        %s296 = smul.addr %s295, 2
        %s297 = smul.addr %s296, 8
        %s298 = scalar_lea.vmem %s5, %s297
        %p299 = scmp.lt.s32.totalorder %s20, 1
        %s300 = scalar_select %p299, %s20, 1
        %s301 = smul.addr %s300, 2
        %s302 = smul.addr %s301, 8
        %s303 = scalar_lea.vmem %s5, %s302
        %p305 = scmp.eq.s32.totalorder %s21, 0
        // Predicated region
        $region79: #{_lambda_.1} parent=73 // pred_check
          %p306 = pneg %p305
        $region80: #{_lambda_.1} parent=73 // pred_check_branch
          %308 = sbr.rel (%p306) target = $region82
        $region81: #{_lambda_.1} parent=73 // pred_region
          %vm309 = vcmask 523264
          %310 = vst.msk [vmem:[%s303] sm:$0xff] %vm309, 0.0
          %311 = vst.msk [vmem:[%s303 + $0x8] sm:$0xff] %vm309, 0.0
          %vm312 = vcmask 7168
          %313 = vst.msk [vmem:[#allocation2] sm:$0xff] %vm312, 0.0
          %314 = vst.msk [vmem:[#allocation2 + $0x8] sm:$0xff] %vm312, 0.0
        $region82: #{_lambda_.1} parent=73 // pred_fallthru
          _
        %v315 = vld [vmem:[%s274] sm:$0xff]
        %v316 = vld [vmem:[%s274 + $0x8] sm:$0xff]
        %v317 = vld [vmem:[%s274 + $0x10] sm:$0xff]
        %v318 = vld [vmem:[%s274 + $0x18] sm:$0xff]
        %v319 = vld [vmem:[%s274 + $0x20] sm:$0xff]
        %v320 = vld [vmem:[%s274 + $0x28] sm:$0xff]
        %v321 = vld [vmem:[%s274 + $0x30] sm:$0xff]
        %v322 = vld [vmem:[%s274 + $0x38] sm:$0xff]
        %v323 = vmul.f32 %v315, %v315
        %v324 = vmul.f32 %v316, %v316
        %v325 = vmul.f32 %v317, %v317
        %v326 = vmul.f32 %v318, %v318
        %v327 = vmul.f32 %v319, %v319
        %v328 = vmul.f32 %v320, %v320
        %v329 = vmul.f32 %v321, %v321
        %v330 = vmul.f32 %v322, %v322
        %v331 = vadd.f32 %v323, %v324
        %v332 = vadd.f32 %v331, %v325
        %v333 = vadd.f32 %v332, %v326
        %v334 = vadd.f32 %v333, %v327
        %v335 = vadd.f32 %v334, %v328
        %v336 = vadd.f32 %v335, %v329
        %v337 = vadd.f32 %v336, %v330
        %v338 = vrot.slane %v337, 4
        %v339 = vadd.f32 %v337, %v338
        %v340 = vrot.slane %v339, 2
        %v341 = vadd.f32 %v339, %v340
        %v342 = vrot.slane %v341, 1
        %v343 = vadd.f32 %v341, %v342
        %v344 = vmax.f32 %v343, 1e-24
        %v345 = vrsqrt.pop %v344
        %v346 = vmul.f32 %v315, %v345
        %v347 = vmul.f32 %v316, %v345
        %v348 = vmul.f32 %v317, %v345
        %v349 = vmul.f32 %v318, %v345
        %v350 = vmul.f32 %v319, %v345
        %v351 = vmul.f32 %v320, %v345
        %v352 = vmul.f32 %v321, %v345
        %v353 = vmul.f32 %v322, %v345
        %v354 = vpack.c.bf16 %v347, %v346
        %v355 = vpack.c.bf16 %v349, %v348
        %v356 = vpack.c.bf16 %v351, %v350
        %v357 = vpack.c.bf16 %v353, %v352
        %v358 = vunpack.c.l.bf16 %v354
        %v359 = vunpack.c.h.bf16 %v354
        %v360 = vunpack.c.l.bf16 %v355
        %v361 = vunpack.c.h.bf16 %v355
        %v362 = vunpack.c.l.bf16 %v356
        %v363 = vunpack.c.h.bf16 %v356
        %v364 = vunpack.c.l.bf16 %v357
        %v365 = vunpack.c.h.bf16 %v357
        %v366 = vsub.f32 %v346, %v358
        %v367 = vsub.f32 %v347, %v359
        %v368 = vsub.f32 %v348, %v360
        %v369 = vsub.f32 %v349, %v361
        %v370 = vsub.f32 %v350, %v362
        %v371 = vsub.f32 %v351, %v363
        %v372 = vsub.f32 %v352, %v364
        %v373 = vsub.f32 %v353, %v365
        %v374 = vpack.c.bf16 %v367, %v366
        %v375 = vpack.c.bf16 %v369, %v368
        %v376 = vpack.c.bf16 %v371, %v370
        %v377 = vpack.c.bf16 %v373, %v372
        %v378 = vld [vmem:[%s1] sm:$0xf]
        %v379 = vld [vmem:[%s1 + $0x4] sm:$0xf]
        %v382 = vunpack.c.l.b16 %v378
        %v383 = vunpack.c.l.b16 %v379
        %v384 = vpack.c.b16 %v383, %v382
        %vm385 = vcmask 523264
        %v387 = vsel %vm385, %v384, 0
        %389 = vmatprep.subr.bf16.mxu0 0
        %390 = vmatpush1.bf16.msra.mxu0 0
        %391 = vmatprep.subr.bf16.mxu0 0
        %392 = vmatpush1.bf16.msra.mxu0 0
        %393 = vmatprep.subr.bf16.mxu0 0
        %394 = vmatpush1.bf16.msra.mxu0 0
        %395 = vmatprep.subr.bf16.mxu0 0
        %396 = vmatpush1.bf16.msra.mxu0 0
        %397 = vmatprep.subr.bf16.mxu0 0
        %398 = vmatpush1.bf16.msra.mxu0 %v377
        %399 = vmatprep.subr.bf16.mxu0 0
        %400 = vmatpush1.bf16.msra.mxu0 %v376
        %401 = vmatprep.subr.bf16.mxu0 0
        %402 = vmatpush1.bf16.msra.mxu0 %v375
        %403 = vmatprep.subr.bf16.mxu0 0
        %404 = vmatpush1.bf16.msra.mxu0 %v374
        %405 = vmatprep.subr.bf16.mxu0 0
        %406 = vmatpush2.bf16.msra.mxu0 0
        %407 = vmatprep.subr.bf16.mxu0 0
        %408 = vmatpush2.bf16.msra.mxu0 0
        %409 = vmatprep.subr.bf16.mxu0 0
        %410 = vmatpush2.bf16.msra.mxu0 0
        %411 = vmatprep.subr.bf16.mxu0 0
        %412 = vmatpush2.bf16.msra.mxu0 0
        %413 = vmatprep.subr.bf16.mxu0 0
        %414 = vmatpush2.bf16.msra.mxu0 0
        %415 = vmatprep.subr.bf16.mxu0 0
        %416 = vmatpush2.bf16.msra.mxu0 0
        %417 = vmatprep.subr.bf16.mxu0 0
        %418 = vmatpush2.bf16.msra.mxu0 0
        %419 = vmatprep.subr.bf16.mxu0 0
        %420 = vmatpush2.bf16.msra.mxu0 0
        %421 = vmatprep.mubr.bf16.mxu0 0
        %422 = vmatmul.mubr.bf16.gmra.mxu0 %v387
        %v423 = vpop.f32.mrf.mxu0
        %v424 = vadd.f32 0.0, %v423
        %v425 = vpop.f32.mrf.mxu0
        %v426 = vpop.f32.mrf.mxu0
        %v427 = vadd.f32 0.0, %v426
        %v428 = vpop.f32.mrf.mxu0
        %429 = vdwg.mxu0
        %430 = vmatprep.subr.bf16.mxu0 0
        %431 = vmatpush1.bf16.msra.mxu0 0
        %432 = vmatprep.subr.bf16.mxu0 0
        %433 = vmatpush1.bf16.msra.mxu0 0
        %434 = vmatprep.subr.bf16.mxu0 0
        %435 = vmatpush1.bf16.msra.mxu0 0
        %436 = vmatprep.subr.bf16.mxu0 0
        %437 = vmatpush1.bf16.msra.mxu0 0
        %438 = vmatprep.subr.bf16.mxu0 0
        %439 = vmatpush1.bf16.msra.mxu0 %v357
        %440 = vmatprep.subr.bf16.mxu0 0
        %441 = vmatpush1.bf16.msra.mxu0 %v356
        %442 = vmatprep.subr.bf16.mxu0 0
        %443 = vmatpush1.bf16.msra.mxu0 %v355
        %444 = vmatprep.subr.bf16.mxu0 0
        %445 = vmatpush1.bf16.msra.mxu0 %v354
        %446 = vmatprep.subr.bf16.mxu0 0
        %447 = vmatpush2.bf16.msra.mxu0 0
        %448 = vmatprep.subr.bf16.mxu0 0
        %449 = vmatpush2.bf16.msra.mxu0 0
        %450 = vmatprep.subr.bf16.mxu0 0
        %451 = vmatpush2.bf16.msra.mxu0 0
        %452 = vmatprep.subr.bf16.mxu0 0
        %453 = vmatpush2.bf16.msra.mxu0 0
        %454 = vmatprep.subr.bf16.mxu0 0
        %455 = vmatpush2.bf16.msra.mxu0 0
        %456 = vmatprep.subr.bf16.mxu0 0
        %457 = vmatpush2.bf16.msra.mxu0 0
        %458 = vmatprep.subr.bf16.mxu0 0
        %459 = vmatpush2.bf16.msra.mxu0 0
        %460 = vmatprep.subr.bf16.mxu0 0
        %461 = vmatpush2.bf16.msra.mxu0 0
        %462 = vmatprep.mubr.bf16.mxu0 0
        %463 = vmatmul.mubr.bf16.gmra.mxu0 %v387
        %v464 = vpop.f32.mrf.mxu0
        %v465 = vadd.f32 %v424, %v464
        %v466 = vpop.f32.mrf.mxu0
        %v467 = vpop.f32.mrf.mxu0
        %v468 = vadd.f32 %v427, %v467
        %v469 = vpop.f32.mrf.mxu0
        %470 = vdwg.mxu0
        %v471 = vld [vmem:[%s2] sm:$0xf]
        %v472 = vld [vmem:[%s2 + $0x4] sm:$0xf]
        %v475 = vunpack.c.l.b16 %v471
        %v476 = vunpack.c.l.b16 %v472
        %v477 = vpack.c.b16 %v476, %v475
        %v479 = vsel %vm385, %v477, 0
        %481 = vmatprep.subr.bf16.mxu0 0
        %482 = vmatpush1.bf16.msra.mxu0 0
        %483 = vmatprep.subr.bf16.mxu0 0
        %484 = vmatpush1.bf16.msra.mxu0 0
        %485 = vmatprep.subr.bf16.mxu0 0
        %486 = vmatpush1.bf16.msra.mxu0 0
        %487 = vmatprep.subr.bf16.mxu0 0
        %488 = vmatpush1.bf16.msra.mxu0 0
        %489 = vmatprep.subr.bf16.mxu0 0
        %490 = vmatpush1.bf16.msra.mxu0 %v357
        %491 = vmatprep.subr.bf16.mxu0 0
        %492 = vmatpush1.bf16.msra.mxu0 %v356
        %493 = vmatprep.subr.bf16.mxu0 0
        %494 = vmatpush1.bf16.msra.mxu0 %v355
        %495 = vmatprep.subr.bf16.mxu0 0
        %496 = vmatpush1.bf16.msra.mxu0 %v354
        %497 = vmatprep.subr.bf16.mxu0 0
        %498 = vmatpush2.bf16.msra.mxu0 0
        %499 = vmatprep.subr.bf16.mxu0 0
        %500 = vmatpush2.bf16.msra.mxu0 0
        %501 = vmatprep.subr.bf16.mxu0 0
        %502 = vmatpush2.bf16.msra.mxu0 0
        %503 = vmatprep.subr.bf16.mxu0 0
        %504 = vmatpush2.bf16.msra.mxu0 0
        %505 = vmatprep.subr.bf16.mxu0 0
        %506 = vmatpush2.bf16.msra.mxu0 0
        %507 = vmatprep.subr.bf16.mxu0 0
        %508 = vmatpush2.bf16.msra.mxu0 0
        %509 = vmatprep.subr.bf16.mxu0 0
        %510 = vmatpush2.bf16.msra.mxu0 0
        %511 = vmatprep.subr.bf16.mxu0 0
        %512 = vmatpush2.bf16.msra.mxu0 0
        %513 = vmatprep.mubr.bf16.mxu0 0
        %514 = vmatmul.mubr.bf16.gmra.mxu0 %v479
        %v515 = vpop.f32.mrf.mxu0
        %v516 = vadd.f32 0.0, %v515
        %v517 = vpop.f32.mrf.mxu0
        %v518 = vpop.f32.mrf.mxu0
        %v519 = vadd.f32 0.0, %v518
        %v520 = vpop.f32.mrf.mxu0
        %521 = vdwg.mxu0
        %v522 = vadd.f32 %v465, %v516
        %v523 = vadd.f32 %v468, %v519
        %v524 = vld [vmem:[%s3] sm:$0xff]
        %v525 = vld [vmem:[%s3 + $0x8] sm:$0xff]
        %527 = vset.pattern.permute.xlu0 0
        %528 = vperm.xlu0 %527, %v524
        %v529 = vpop.permute.xlu0 %528
        %532 = vset.pattern.permute.xlu0 0
        %533 = vperm.xlu0 %532, %v525
        %v534 = vpop.permute.xlu0 %533
        %v536 = vadd.f32 %v522, %v529
        %v537 = vadd.f32 %v523, %v534
        %v538 = vmax.f32 %v536, %v537
        %v539 = vrot.slane %v538, 4
        %v540 = vmax.f32 %v538, %v539
        %v541 = vrot.slane %v540, 2
        %v542 = vmax.f32 %v540, %v541
        %v543 = vrot.slane %v542, 1
        %v544 = vmax.f32 %v542, %v543
        %v545 = vsub.f32 %v536, %v544
        %v546 = vsub.f32 %v537, %v544
        %v547 = vmul.f32 %v545, 1.442695
        %v548 = vpow.pop %v547
        %v549 = vmul.f32 %v546, 1.442695
        %v550 = vpow.pop %v549
        %v551 = vadd.f32 %v548, %v550
        %v552 = vrot.slane %v551, 4
        %v553 = vadd.f32 %v551, %v552
        %v554 = vrot.slane %v553, 2
        %v555 = vadd.f32 %v553, %v554
        %v556 = vrot.slane %v555, 1
        %v557 = vadd.f32 %v555, %v556
        %v558 = vrcp.pop %v557
        %v559 = vmul.f32 %v548, %v558
        %v560 = vmul.f32 %v550, %v558
        %v561 = vld [vmem:[#allocation2] sm:$0xff]
        %v562 = vld [vmem:[#allocation2 + $0x8] sm:$0xff]
        %563 = vadd.xlane.f32.xlu0 %v559
        %v564 = vpop.xlane.xlu0 %563
        %565 = vadd.xlane.f32.xlu0 %v560
        %v566 = vpop.xlane.xlu0 %565
        %v567 = vadd.f32 %v561, %v564
        %v568 = vadd.f32 %v562, %v566
        %vm569 = vcmask 7168
        %570 = vst.msk [vmem:[#allocation2] sm:$0xff] %vm569, %v567
        %571 = vst.msk [vmem:[#allocation2 + $0x8] sm:$0xff] %vm569, %v568
        %v572 = vld [vmem:[%s303] sm:$0xff]
        %v573 = vld [vmem:[%s303 + $0x8] sm:$0xff]
        %v574 = vpack.c.bf16 %v560, %v559
        %575 = vmatprep.subr.bf16.mxu0 0
        %576 = vmatpush1.bf16.xpose.msra.mxu0 0
        %577 = vmatprep.subr.bf16.mxu0 0
        %578 = vmatpush1.bf16.xpose.msra.mxu0 0
        %579 = vmatprep.subr.bf16.mxu0 0
        %580 = vmatpush1.bf16.xpose.msra.mxu0 0
        %581 = vmatprep.subr.bf16.mxu0 0
        %582 = vmatpush1.bf16.xpose.msra.mxu0 0
        %583 = vmatprep.subr.bf16.mxu0 0
        %584 = vmatpush1.bf16.xpose.msra.mxu0 %v357
        %585 = vmatprep.subr.bf16.mxu0 0
        %586 = vmatpush1.bf16.xpose.msra.mxu0 %v356
        %587 = vmatprep.subr.bf16.mxu0 0
        %588 = vmatpush1.bf16.xpose.msra.mxu0 %v355
        %589 = vmatprep.subr.bf16.mxu0 0
        %590 = vmatpush1.bf16.xpose.msra.mxu0 %v354
        %591 = vmatprep.subr.bf16.mxu0 0
        %592 = vmatpush2.bf16.xpose.msra.mxu0 0
        %593 = vmatprep.subr.bf16.mxu0 0
        %594 = vmatpush2.bf16.xpose.msra.mxu0 0
        %595 = vmatprep.subr.bf16.mxu0 0
        %596 = vmatpush2.bf16.xpose.msra.mxu0 0
        %597 = vmatprep.subr.bf16.mxu0 0
        %598 = vmatpush2.bf16.xpose.msra.mxu0 0
        %599 = vmatprep.subr.bf16.mxu0 0
        %600 = vmatpush2.bf16.xpose.msra.mxu0 0
        %601 = vmatprep.subr.bf16.mxu0 0
        %602 = vmatpush2.bf16.xpose.msra.mxu0 0
        %603 = vmatprep.subr.bf16.mxu0 0
        %604 = vmatpush2.bf16.xpose.msra.mxu0 0
        %605 = vmatprep.subr.bf16.mxu0 0
        %606 = vmatpush2.bf16.xpose.msra.mxu0 0
        %607 = vmatprep.mubr.bf16.mxu0 0
        %608 = vmatmul.mubr.bf16.gmra.mxu0 %v574
        %v609 = vpop.f32.mrf.mxu0
        %v610 = vadd.f32 0.0, %v609
        %v611 = vpop.f32.mrf.mxu0
        %v612 = vpop.f32.mrf.mxu0
        %v613 = vadd.f32 0.0, %v612
        %v614 = vpop.f32.mrf.mxu0
        %615 = vdwg.mxu0
        %v616 = vadd.f32 %v572, %v610
        %v617 = vadd.f32 %v573, %v613
        %618 = vst.msk [vmem:[%s303] sm:$0xff] %vm385, %v616
        %619 = vst.msk [vmem:[%s303 + $0x8] sm:$0xff] %vm385, %v617
        %p620 = scmp.eq.s32.totalorder %s21, 1
        // Predicated region
        $region83: #{_lambda_.1} parent=73 // pred_check
          %p621 = pneg %p620
        $region84: #{_lambda_.1} parent=73 // pred_check_branch
          %623 = sbr.rel (%p621) target = $region86
        $region85: #{_lambda_.1} parent=73 // pred_region
          %v624 = vld [vmem:[%s303] sm:$0xff]
          %v625 = vld [vmem:[%s303 + $0x8] sm:$0xff]
          %v626 = vld [vmem:[#allocation2] sm:$0xff]
          %v627 = vld [vmem:[#allocation2 + $0x8] sm:$0xff]
          %v628 = vld [vmem:[%s4] sm:$0xff]
          %v629 = vld [vmem:[%s4 + $0x8] sm:$0xff]
          %631 = vset.pattern.permute.xlu0 0
          %632 = vperm.xlu0 %631, %v626
          %v633 = vpop.permute.xlu0 %632
          %636 = vset.pattern.permute.xlu0 0
          %637 = vperm.xlu0 %636, %v627
          %v638 = vpop.permute.xlu0 %637
          %v640 = vmul.f32 %v633, %v628
          %v641 = vmul.f32 %v638, %v629
          %v642 = vsub.f32 %v624, %v640
          %v643 = vsub.f32 %v625, %v641
          %v644 = vmul.f32 %v642, %v642
          %v645 = vmul.f32 %v643, %v643
          %v646 = vsel %vm385, %v644, 0.0
          %647 = vadd.xlane.f32.xlu0 %v646
          %v648 = vpop.xlane.xlu0 %647
          %v649 = vsel %vm385, %v645, 0.0
          %650 = vadd.xlane.f32.xlu0 %v649
          %v651 = vpop.xlane.xlu0 %650
          %v652 = vmax.f32 %v648, 1e-24
          %v653 = vmax.f32 %v651, 1e-24
          %v654 = vrsqrt.pop %v652
          %v655 = vrsqrt.pop %v653
          %v656 = vmul.f32 %v642, %v654
          %v657 = vmul.f32 %v643, %v655
          %v658 = vmul.f32 %v656, %v656
          %v659 = vmul.f32 %v657, %v657
          %v660 = vsel %vm385, %v658, 0.0
          %v661 = vsel %vm385, %v659, 0.0
          %v662 = vadd.f32 %v660, %v661
          %663 = vadd.xlane.f32.xlu0 %v662
          %v664 = vpop.xlane.xlu0 %663
          %v665 = vrot.slane %v664, 4
          %v666 = vadd.f32 %v664, %v665
          %v667 = vrot.slane %v666, 2
          %v668 = vadd.f32 %v666, %v667
          %v669 = vrot.slane %v668, 1
          %v670 = vadd.f32 %v668, %v669
          %s671 = vtos %v670
          %v672 = vstv %s671
          %v673 = vmax.f32 %v672, 1e-24
          %v674 = vrsqrt.pop %v673
          %v675 = vmul.f32 %v656, %v674
          %v676 = vmul.f32 %v657, %v674
          %677 = vst.msk [vmem:[%s303] sm:$0xff] %vm385, %v675
          %678 = vst.msk [vmem:[%s303 + $0x8] sm:$0xff] %vm385, %v676
        $region86: #{_lambda_.1} parent=73 // pred_fallthru
          _
        %p679 = scmp.lt.s32.totalorder %s20, 1
        %s680 = scalar_select %p679, %s20, 1
        %s681 = smul.addr %s680, 2
        %s682 = smul.addr %s681, 8
        %s683 = scalar_lea.vmem %s5, %s682
        // Predicated region
        $region87: #{_lambda_.1} parent=73 // pred_check
          %p684 = pneg %p158
        $region88: #{_lambda_.1} parent=73 // pred_check_branch
          %686 = sbr.rel (%p684) target = $region90
        $region89: #{_lambda_.1} parent=73 // pred_region
          _
        $region90: #{_lambda_.1} parent=73 // pred_fallthru
          _
      $region74: #{_lambda_.1} parent=5 // pred_fallthru
        _
      %p687 = scmp.le.s32.totalorder 2, %s11
      // Predicated region
      $region91: #{_lambda_.1} parent=5 // pred_check
        %p688 = pneg %p687
      $region92: #{_lambda_.1} parent=5 // pred_check_branch
        %690 = sbr.rel (%p688) target = $region94
      $region93: #{_lambda_.1} parent=5 // pred_region
        %s691 = ssub.s32 %s11, 2
        // Predicated region
        $region95: #{_lambda_.1} parent=93 // pred_check
          %p692 = pneg %p164
        $region96: #{_lambda_.1} parent=93 // pred_check_branch
          %694 = sbr.rel (%p692) target = $region98
        $region97: #{_lambda_.1} parent=93 // pred_region
          %p695 = scmp.lt.s32.totalorder %s22, 1
          %s696 = scalar_select %p695, %s22, 1
          %s697 = smul.addr %s696, 2
          %s698 = smul.addr %s697, 8
          %s699 = scalar_lea.vmem %s5, %s698
        $region98: #{_lambda_.1} parent=93 // pred_fallthru
          _
      $region94: #{_lambda_.1} parent=5 // pred_fallthru
        _
    $region6: #{_lambda_.1} parent=1 // loop_footer
      %s15 = sadd.s32 1, %s11
    $region7: #{_lambda_.1} parent=1 // loop_footer_branch
      %10 = sbr.rel target = $region3
    $region8: #{_lambda_.1} parent=1 // loop_exit
      _

</llo_original>
